<compile_context>
chip_gen: v7x
topology: tpu7x:2x2x1
jax: 0.10.0
libtpu: 0.0.40
codegen_flags: <defaults>
</compile_context>

<pallas_src>
import jax
import jax.numpy as jnp
from jax.experimental import pallas as pl
from jax.experimental.pallas import tpu as pltpu

_LANE = 128


def _sin_kernel(x_ref, o_ref):
    # Elementwise hot path over the whole VMEM tile.  Compute in f32 (no-op
    # cast for f32 inputs) so bf16/f16 inputs keep f32-level accuracy.
    x = x_ref[...]
    o_ref[...] = jnp.sin(x.astype(jnp.float32)).astype(o_ref.dtype)


def _vreg_rows(itemsize: int) -> int:
    # Rows per full vreg: sub-32-bit dtypes pack along sublanes (bf16 -> 16,
    # int8/fp8 -> 32); keeps blocks aligned to the native packing so stores
    # stay unmasked and no packed-row relayouts are needed.
    return 8 * max(1, 4 // itemsize)


def _pick_width(total: int, min_rows: int) -> int:
    """Largest lane-multiple width C dividing `total`, preferring one that
    leaves rows >= 2*min_rows (full vreg occupancy + >= 2 grid steps), then
    rows >= min_rows, then the widest divisor."""
    cands = [c for c in (8192, 4096, 2048, 1024, 512, 256, 128) if total % c == 0]
    for thresh in (2 * min_rows, min_rows, 1):
        for c in cands:
            if total // c >= thresh:
                return c
    return _LANE


def _pick_tile_rows(rows: int, bytes_per_row: int, min_rows: int,
                    target_block_bytes: int) -> int:
    target = max(min_rows,
                 (target_block_bytes // bytes_per_row) // min_rows * min_rows)
    if rows > target:
        return target                      # grid has >= 2 steps automatically
    if rows >= 2 * min_rows:
        # Fits one target tile, but still split into >= 2 blocks so v7x's two
        # TensorCores both get work; neutral on 1-TC v5e/v6e (one extra
        # ~0.35 us grid step).
        half = (rows + 1) // 2
        return ((half + min_rows - 1) // min_rows) * min_rows
    return rows                            # tiny input: single full-extent block


def _block_bytes_and_limit():
    # 4 MiB tiles / 32 MiB scoped VMEM are safe on every generation (v7x has
    # only 64 MiB physical VMEM per TC).  On 128 MiB parts (v5e/v6e), 8 MiB
    # tiles are free headroom and shave per-step overhead slightly.
    try:
        vmem = getattr(pltpu.get_tpu_info(), "vmem_capacity_bytes", 0)
    except Exception:
        vmem = 0
    if vmem >= (96 << 20):
        return 8 << 20, 64 << 20
    return 4 << 20, 32 << 20


def pallas_sin(x):
    """Elementwise sin via a Pallas TPU kernel (matches torch.sin semantics)."""
    orig_shape = x.shape
    dtype = x.dtype
    n = x.size
    if n == 0:
        return x

    itemsize = jnp.dtype(dtype).itemsize
    flat = x.reshape(-1)

    # Lane-aligned bulk goes through the kernel (zero-copy reshapes); the
    # < 128-element tail (rare) is tiny VPU work done in the wrapper.
    n_bulk = (n // _LANE) * _LANE
    n_tail = n - n_bulk
    if n_bulk == 0:
        return jnp.sin(flat.astype(jnp.float32)).astype(dtype).reshape(orig_shape)

    bulk = flat[:n_bulk] if n_tail else flat

    min_rows = _vreg_rows(itemsize)
    C = _pick_width(n_bulk, min_rows)
    rows = n_bulk // C

    target_block_bytes, vmem_limit = _block_bytes_and_limit()
    tile_rows = _pick_tile_rows(rows, C * itemsize, min_rows, target_block_bytes)
    grid = (pl.cdiv(rows, tile_rows),)

    out2d = pl.pallas_call(
        _sin_kernel,
        out_shape=jax.ShapeDtypeStruct((rows, C), dtype),
        grid=grid,
        in_specs=[pl.BlockSpec((tile_rows, C), lambda i: (i, 0))],
        out_specs=pl.BlockSpec((tile_rows, C), lambda i: (i, 0)),
        compiler_params=pltpu.CompilerParams(
            dimension_semantics=("parallel",),
            vmem_limit_bytes=vmem_limit,
        ),
        # Scheduler hint only (sin is VPU polynomial work, not EUP); kept
        # consistent with the traffic the kernel actually moves.
        cost_estimate=pl.CostEstimate(
            flops=0,
            transcendentals=n_bulk,
            bytes_accessed=2 * n_bulk * itemsize,
        ),
    )(bulk.reshape(rows, C))

    out_bulk = out2d.reshape(-1)
    if n_tail:
        tail = jnp.sin(flat[n_bulk:].astype(jnp.float32)).astype(dtype)
        return jnp.concatenate([out_bulk, tail]).reshape(orig_shape)
    return out_bulk.reshape(orig_shape)


if __name__ == "__main__":
    key = jax.random.PRNGKey(0)

    # Small NCHW-shaped input consistent with typical usage of the module.
    x = jax.random.normal(key, (2, 4, 16, 16), dtype=jnp.float32)
    out = jax.block_until_ready(pallas_sin(x))
    ref = jnp.sin(x)
    assert out.shape == x.shape and out.dtype == x.dtype
    assert jnp.allclose(out, ref, atol=1e-6, rtol=1e-6)

    # Non-lane-aligned size: exercises the aligned-bulk + wrapper-tail path.
    x2 = jax.random.normal(jax.random.PRNGKey(1), (3, 5, 7, 9), dtype=jnp.float32)
    out2 = jax.block_until_ready(pallas_sin(x2))
    assert jnp.allclose(out2, jnp.sin(x2), atol=1e-6, rtol=1e-6)

    # bf16 input: exercises the dtype-aware sublane packing (16 rows / vreg).
    x3 = jax.random.normal(jax.random.PRNGKey(2), (4, 8, 64), dtype=jnp.bfloat16)
    out3 = jax.block_until_ready(pallas_sin(x3))
    ref3 = jnp.sin(x3.astype(jnp.float32)).astype(jnp.bfloat16)
    assert out3.dtype == jnp.bfloat16
    assert jnp.allclose(out3.astype(jnp.float32), ref3.astype(jnp.float32), atol=2e-2)

    print("KERNEL_OK")
</pallas_src>

<mosaic_0001>
module attributes {stable_mosaic.version = 11 : i64} {
  func.func @_sin_kernel(%arg0: i32, %arg1: memref<8x128xf32, #tpu.memory_space<vmem>>, %arg2: memref<8x128xf32, #tpu.memory_space<vmem>>) attributes {dimension_semantics = [#tpu.dimension_semantics<parallel>], iteration_bounds = array<i64: 2>, scalar_prefetch = 0 : i64, scratch_operands = 0 : i64, tpu.core_type = #tpu.core_type<tc>, window_params = [{transform_indices = @transform_0, window_bounds = array<i64: 8, 128>}, {transform_indices = @transform_1, window_bounds = array<i64: 8, 128>}]} {
    %c0 = arith.constant 0 : index
    %c0_0 = arith.constant 0 : index
    %0 = vector.load %arg1[%c0, %c0_0] : memref<8x128xf32, #tpu.memory_space<vmem>>, vector<8x128xf32>
    %1 = math.sin %0 : vector<8x128xf32>
    %c0_1 = arith.constant 0 : index
    %c0_2 = arith.constant 0 : index
    %2 = vector.load %arg2[%c0_1, %c0_2] : memref<8x128xf32, #tpu.memory_space<vmem>>, vector<8x128xf32>
    tpu.vector_store %arg2[%c0_1, %c0_2], %1 {strides = array<i32>} : memref<8x128xf32, #tpu.memory_space<vmem>>, vector<8x128xf32>,
    return
  }
  func.func @transform_0(%arg0: i32) -> (i32, i32) {
    %c0_i32 = arith.constant 0 : i32
    %c0_i32_0 = arith.constant 0 : i32
    return %arg0, %c0_i32 : i32, i32
  }
  func.func @transform_1(%arg0: i32) -> (i32, i32) {
    %c0_i32 = arith.constant 0 : i32
    %c0_i32_0 = arith.constant 0 : i32
    return %arg0, %c0_i32 : i32, i32
  }
}

</mosaic_0001>

<llo_original>
// kernel: tpu_custom_call.1
$region0: #{tpu_custom_call.1}
  #allocation0 [shape = 'u32[]', space=smem, size = 0x4, offset = 0x4, fixed_abs, tag = 'smem constant byte address 0x4 - core index']
  #allocation1 [shape = 'u32[144,128]{1,0:T(1,128)}', space=vmem, size = 0x12000, scoped, tag = 'internal scratch']
  %s0 = inlined_call_operand.hbm [shape: f32[16,128], index: 0, kind: input, shape index: {}]
  %s1 = inlined_call_operand.hbm [shape: f32[16,128], index: 1, kind: output, shape index: {}]
  %s2 = sld [smem:[#allocation0]]
  $region41: #{tpu_custom_call.1} parent=0
    _
  %s4 = ssub.s32 1, %s2
  %s5 = scalar_select 0, %s4, %s2
  $region1: #{tpu_custom_call.1} parent=0
    #allocation2 [shape = 'u8[8192]{0}', space=vmem, size = 0x2000, scoped, tag = 'input window, operand 0']
    #allocation3 [shape = 's32[2]{0}', space=sflag, size = 0x8, scoped, tag = 'scoped memory for tpu_custom_call.1']
    #allocation4 [shape = 's32[2]{0}', space=sflag, size = 0x8, scoped, tag = 'scoped memory for tpu_custom_call.1']
    #allocation5 [shape = 'u8[8192]{0}', space=vmem, size = 0x2000, scoped, tag = 'output window, operand 0']
    %6 = vsyncpa [#allocation3], 0
    %s7 = scalar_lea.sflag [#allocation3], 1
    %8 = vsyncpa %s7, 0
    %9 = vsyncpa [#allocation4], 0
    %s10 = scalar_lea.sflag [#allocation4], 1
    %11 = vsyncpa %s10, 0
    loop: start=0, step=1, limit=4
    $region2: #{tpu_custom_call.1} parent=1 // loop_pre_header
      _
    $region3: #{tpu_custom_call.1} parent=1 // loop_header
      %s13 = sphi 0, %s17
      %p14 = scmp.ge.s32.totalorder %s13, 4
      %s23 = sphi 0, %s25
      %s26 = sphi 0, %s23
      %s27 = sphi 0, %s26
      %s43 = sphi 0, %s27
      %s49 = sphi 0, %s51
      %s52 = sphi 0, %s49
      %s53 = sphi 0, %s52
      %s69 = sphi 0, %s53
    $region4: #{tpu_custom_call.1} parent=1 // loop_header_branch
      %16 = sbr.rel (%p14) target = $region8
    $region5: #{tpu_custom_call.1} parent=1 // loop_body
      %s18 = ssub.s32 %s13, 1
      %s19 = ssub.s32 %s13, 2
      %s20 = sadd.s32 %s13, 1
      %s21 = ssub.s32 %s13, %s20
      %p22 = scmp.eq.s32.totalorder %s21, 0
      %s24 = sadd.s32 %s23, 1
      %s25 = scalar_select %p22, %s23, %s24
      %p28 = pneg %p22
      %p29 = scmp.eq.s32.totalorder %s13, 1
      %p30 = por %p28, %p29
      %p31 = scmp.ne.s32.totalorder %s23, %s26
      %p32 = scmp.eq.s32.totalorder %s13, 0
      %p33 = por %p31, %p32
      %p34 = scmp.ne.s32.totalorder %s23, %s26
      %p35 = scmp.eq.s32.totalorder %s18, 1
      %p36 = por %p34, %p35
      %p37 = scmp.ne.s32.totalorder %s26, %s27
      %p38 = scmp.eq.s32.totalorder %s18, 0
      %p39 = por %p37, %p38
      %p40 = scmp.ne.s32.totalorder %s26, %s27
      %p41 = scmp.eq.s32.totalorder %s19, 1
      %p42 = por %p40, %p41
      %p44 = scmp.ne.s32.totalorder %s27, %s43
      %p45 = scmp.eq.s32.totalorder %s19, 0
      %p46 = por %p44, %p45
      %s47 = ssub.s32 %s13, %s20
      %p48 = scmp.eq.s32.totalorder %s47, 0
      %s50 = sadd.s32 %s49, 1
      %s51 = scalar_select %p48, %s49, %s50
      %p54 = pneg %p48
      %p55 = scmp.eq.s32.totalorder %s13, 1
      %p56 = por %p54, %p55
      %p57 = scmp.ne.s32.totalorder %s49, %s52
      %p58 = scmp.eq.s32.totalorder %s13, 0
      %p59 = por %p57, %p58
      %p60 = scmp.ne.s32.totalorder %s49, %s52
      %p61 = scmp.eq.s32.totalorder %s18, 1
      %p62 = por %p60, %p61
      %p63 = scmp.ne.s32.totalorder %s52, %s53
      %p64 = scmp.eq.s32.totalorder %s18, 0
      %p65 = por %p63, %p64
      %p66 = scmp.ne.s32.totalorder %s52, %s53
      %p67 = scmp.eq.s32.totalorder %s19, 1
      %p68 = por %p66, %p67
      %p70 = scmp.ne.s32.totalorder %s53, %s69
      %p71 = scmp.eq.s32.totalorder %s19, 0
      %p72 = por %p70, %p71
      %p73 = scmp.le.s32.totalorder 1, %s13
      %p74 = scmp.lt.s32.totalorder %s13, 3
      %p75 = pnand %p73, %p74
      %p76 = pneg %p75
      // Predicated region
      $region9: #{tpu_custom_call.1} parent=5 // pred_check
        _
      $region10: #{tpu_custom_call.1} parent=5 // pred_check_branch
        %78 = sbr.rel (%p75) target = $region12
      $region11: #{tpu_custom_call.1} parent=5 // pred_region
        %s79 = ssub.s32 %s13, 1
      $region12: #{tpu_custom_call.1} parent=5 // pred_fallthru
        _
      %p80 = scmp.lt.s32.totalorder %s13, 2
      // Predicated region
      $region13: #{tpu_custom_call.1} parent=5 // pred_check
        %p81 = pneg %p80
      $region14: #{tpu_custom_call.1} parent=5 // pred_check_branch
        %83 = sbr.rel (%p81) target = $region16
      $region15: #{tpu_custom_call.1} parent=5 // pred_region
        // Predicated region
        $region17: #{tpu_custom_call.1} parent=15 // pred_check
          %p84 = pneg %p33
        $region18: #{tpu_custom_call.1} parent=15 // pred_check_branch
          %86 = sbr.rel (%p84) target = $region20
        $region19: #{tpu_custom_call.1} parent=15 // pred_region
          %s87 = sand.u32 %s23, 1
          %s88 = scalar_lea.sflag [#allocation3], %s87
          %s89 = sand.u32 %s23, 1
          %s90 = smul.addr %s89, 8
          %s91 = scalar_lea.vmem [#allocation2], %s90
          %s93 = ssub.s32 128, 128
          %94 = vsyncadd %s88, %s93
          %s95 = smul.addr %s13, 128
          %s96 = scalar_lea.hbm %s0, %s95
          %s98 = sshll.u32 %s91, 4
          %s99 = int_to_ptr.vmem [resolvable:$true] %s98
          %101 = dma.hbm_to_vmem [thread:$0]  %s96, 128, %s99, %s88
        $region20: #{tpu_custom_call.1} parent=15 // pred_fallthru
          _
      $region16: #{tpu_custom_call.1} parent=5 // pred_fallthru
        _
      %p102 = scmp.le.s32.totalorder 1, %s13
      %p103 = scmp.lt.s32.totalorder %s13, 3
      %p104 = pnand %p102, %p103
      %p105 = pneg %p104
      // Predicated region
      $region21: #{tpu_custom_call.1} parent=5 // pred_check
        _
      $region22: #{tpu_custom_call.1} parent=5 // pred_check_branch
        %107 = sbr.rel (%p104) target = $region24
      $region23: #{tpu_custom_call.1} parent=5 // pred_region
        %s108 = ssub.s32 %s13, 1
        %s109 = sand.u32 %s26, 1
        %s110 = scalar_lea.sflag [#allocation3], %s109
        %s111 = sand.u32 %s26, 1
        %s112 = smul.addr %s111, 8
        %s113 = scalar_lea.vmem [#allocation2], %s112
        // Predicated region
        $region25: #{tpu_custom_call.1} parent=23 // pred_check
          %p114 = pneg %p39
        $region26: #{tpu_custom_call.1} parent=23 // pred_check_branch
          %116 = sbr.rel (%p114) target = $region28
        $region27: #{tpu_custom_call.1} parent=23 // pred_region
          %117 = dma.done %s110, 128
        $region28: #{tpu_custom_call.1} parent=23 // pred_fallthru
          _
        %s118 = sand.u32 %s26, 1
        %s119 = scalar_lea.sflag [#allocation3], %s118
        %s120 = sand.u32 %s26, 1
        %s121 = smul.addr %s120, 8
        %s122 = scalar_lea.vmem [#allocation2], %s121
        %p123 = pneg %p39
        %p124 = pneg %p36
        %p125 = pneg %p65
        %p126 = pneg %p62
        %s127 = sand.u32 %s52, 1
        %s128 = scalar_lea.sflag [#allocation4], %s127
        %s129 = sand.u32 %s52, 1
        %s130 = smul.addr %s129, 8
        %s131 = scalar_lea.vmem [#allocation5], %s130
        %v132 = vld [vmem:[%s113] sm:$0xff]
        %v133 = vand.u32 2147483647, %v132
        %vm134 = vcmp.le.f32.partialorder %v133, 0.7853982
        %vm135 = vcmp.lt.s32.totalorder %v132, 0
        %v136 = vand.u32 %v132, 2139095040
        %v137 = vshrl.u32 %v136, 23
        %v138 = vsub.s32 %v137, 127
        %v139 = vand.u32 2147483647, %v132
        %v140 = vand.u32 %v139, 8388607
        %v141 = vor.u32 %v140, 8388608
        %v142 = vsub.s32 0, %v141
        %v143 = vadd.s32 %v138, 1
        %vm144 = vcmp.gt.s32.totalorder %v143, 0
        %v145 = vsel %vm144, %v143, 0
        %v146 = vshrl.u32 %v145, 5
        %v147 = vand.u32 %v145, 31
        %v148 = vsub.s32 32, %v147
        %v149 = vshrl.u32 683565275, %v148
        %v150 = vshll.u32 683565275, %v147
        %v151 = vshrl.u32 2475754826, %v148
        %v152 = vor.u32 %v150, %v151
        %v153 = vshll.u32 2475754826, %v147
        %v154 = vshrl.u32 2131351028, %v148
        %v155 = vor.u32 %v153, %v154
        %v156 = vshll.u32 2131351028, %v147
        %v157 = vshrl.u32 2102212464, %v148
        %v158 = vor.u32 %v156, %v157
        %v159 = vshll.u32 2102212464, %v147
        %v160 = vshrl.u32 920167782, %v148
        %v161 = vor.u32 %v159, %v160
        %v162 = vshll.u32 920167782, %v147
        %v163 = vshrl.u32 1326507024, %v148
        %v164 = vor.u32 %v162, %v163
        %vm165 = vcmp.lt.s32.totalorder %v146, 1
        %vm166 = vcmp.lt.s32.totalorder %v146, 2
        %vm167 = vcmp.lt.s32.totalorder %v146, 3
        %vm168 = vcmp.lt.s32.totalorder %v146, 4
        %v169 = vsel %vm165, %v149, %v152
        %v170 = vsel %vm168, %v158, 2102212464
        %v171 = vsel %vm167, %v155, %v170
        %v172 = vsel %vm166, %v169, %v171
        %v173 = vsel %vm165, %v152, %v155
        %v174 = vsel %vm168, %v161, 920167782
        %v175 = vsel %vm167, %v158, %v174
        %v176 = vsel %vm166, %v173, %v175
        %v177 = vsel %vm165, %v155, %v158
        %v178 = vsel %vm168, %v164, 1326507024
        %v179 = vsel %vm167, %v161, %v178
        %v180 = vsel %vm166, %v177, %v179
        %v181 = vshll.u32 %v141, 8
        %v182 = vmul.u32.u64.compose %v181, %v180
        %v183 = vextract.low.u32 %v182
        %v184 = vextract.high.u32 %v182
        %v185 = vmul.u32.u64.compose %v181, %v176
        %v186 = vextract.low.u32 %v185
        %v187 = vextract.high.u32 %v185
        %v188 = vmul.u32 %v181, %v172
        %v189 = vadd.s32 %v184, %v186
        %vm190 = vc.u32 %v184, %v186
        %v191 = vadd.s32 %v187, 1
        %v192 = vsel %vm190, %v191, %v187
        %v193 = vadd.s32 %v188, %v192
        %v194 = vadd.s32 %v193, 536870912
        %v195 = vshrl.u32 %v194, 30
        %v196 = vshll.u32 %v195, 30
        %v197 = vsub.s32 %v193, %v196
        %vm198 = vcmp.lt.s32.totalorder %v197, 0
        %v199 = vsub.s32 0, %v197
        %v200 = vsel %vm198, %v199, %v197
        %v201 = vclz %v200
        %v202 = vsub.s32 %v201, 2
        %vm203 = vcmp.gt.s32.totalorder 0, %v202
        %v204 = vsel %vm203, 0, %v202
        %v205 = vsub.s32 32, %v204
        %v206 = vshll.u32 %v197, %v204
        %v207 = vshrl.u32 %v189, %v205
        %v208 = vor.u32 %v206, %v207
        %v209 = vsub.s32 4294967266, %v204
        %v210 = vadd.s32 %v209, 127
        %v211 = vshll.u32 %v210, 23
        %v212 = vor.u32 4788187, %v211
        %v213 = vand.u32 2147483647, %v212
        %v215 = vcvt.s32.f32 %v208
        %v216 = vmul.f32 %v215, %v213
        %v217 = vxor.u32 %v216, 2147483648
        %v218 = vsel %vm135, %v217, %v216
        %v219 = vsub.s32 4, %v195
        %v220 = vsel %vm135, %v219, %v195
        %v221 = vsel %vm134, %v132, %v218
        %v222 = vsel %vm134, 0, %v220
        %v223 = vcosq.f32.pop %v221
        %v224 = vsinq.f32.pop %v221
        %vm225 = vweird.f32 %v132
        %v226 = vadd.s32 %v222, 3
        %v227 = vand.u32 %v226, 3
        %vm228 = vcmp.lt.s32.totalorder %v227, 2
        %vm229 = vcmp.eq.s32.totalorder %v227, 0
        %v230 = vxor.u32 %v224, 2147483648
        %v231 = vsel %vm229, %v223, %v230
        %vm232 = vcmp.eq.s32.totalorder %v227, 2
        %v233 = vxor.u32 %v223, 2147483648
        %v234 = vsel %vm232, %v233, %v224
        %v235 = vsel %vm228, %v231, %v234
        %v236 = vsel %vm225, nan, %v235
        %237 = vst [vmem:[%s131] sm:$0xff] %v236
        %s238 = sand.u32 %s52, 1
        %s239 = scalar_lea.sflag [#allocation4], %s238
        %s240 = sand.u32 %s52, 1
        %s241 = smul.addr %s240, 8
        %s242 = scalar_lea.vmem [#allocation5], %s241
        // Predicated region
        $region29: #{tpu_custom_call.1} parent=23 // pred_check
          %p243 = pneg %p62
        $region30: #{tpu_custom_call.1} parent=23 // pred_check_branch
          %245 = sbr.rel (%p243) target = $region32
        $region31: #{tpu_custom_call.1} parent=23 // pred_region
          %s247 = ssub.s32 128, 128
          %248 = vsyncadd %s239, %s247
          %s249 = smul.addr %s18, 128
          %s250 = scalar_lea.hbm %s1, %s249
          %s252 = sshll.u32 %s242, 4
          %s253 = int_to_ptr.vmem [resolvable:$true] %s252
          %255 = dma.vmem_to_hbm [thread:$0]  %s253, 128, %s250, %s239
        $region32: #{tpu_custom_call.1} parent=23 // pred_fallthru
          _
      $region24: #{tpu_custom_call.1} parent=5 // pred_fallthru
        _
      %p256 = scmp.le.s32.totalorder 2, %s13
      // Predicated region
      $region33: #{tpu_custom_call.1} parent=5 // pred_check
        %p257 = pneg %p256
      $region34: #{tpu_custom_call.1} parent=5 // pred_check_branch
        %259 = sbr.rel (%p257) target = $region36
      $region35: #{tpu_custom_call.1} parent=5 // pred_region
        %s260 = ssub.s32 %s13, 2
        // Predicated region
        $region37: #{tpu_custom_call.1} parent=35 // pred_check
          %p261 = pneg %p68
        $region38: #{tpu_custom_call.1} parent=35 // pred_check_branch
          %263 = sbr.rel (%p261) target = $region40
        $region39: #{tpu_custom_call.1} parent=35 // pred_region
          %s264 = sand.u32 %s53, 1
          %s265 = scalar_lea.sflag [#allocation4], %s264
          %s266 = sand.u32 %s53, 1
          %s267 = smul.addr %s266, 8
          %s268 = scalar_lea.vmem [#allocation5], %s267
          %269 = dma.done %s265, 128
        $region40: #{tpu_custom_call.1} parent=35 // pred_fallthru
          _
      $region36: #{tpu_custom_call.1} parent=5 // pred_fallthru
        _
    $region6: #{tpu_custom_call.1} parent=1 // loop_footer
      %s17 = sadd.s32 1, %s13
    $region7: #{tpu_custom_call.1} parent=1 // loop_footer_branch
      %12 = sbr.rel target = $region3
    $region8: #{tpu_custom_call.1} parent=1 // loop_exit
      _
    %270 = vsyncpa [#allocation3], 1
    %s271 = scalar_lea.sflag [#allocation3], 1
    %272 = vsyncpa %s271, 1
    %273 = vsyncpa [#allocation4], 1
    %s274 = scalar_lea.sflag [#allocation4], 1
    %275 = vsyncpa %s274, 1

</llo_original>
